<compile_context>
chip_gen: v5e
topology: v5e:2x2
jax: 0.10.0
libtpu: 0.0.40
codegen_flags: <defaults>
</compile_context>

<pallas_src>
import functools

import jax
import jax.numpy as jnp
from jax.experimental import pallas as pl
from jax.experimental.pallas import tpu as pltpu

NUM_OPS = 4       # brightness, invert, solarize, contrast
NUM_STAGES = 3    # operation_count
TEMPERATURE = 0.1


# --------------------------------------------------------------------------- #
# Kernel
# --------------------------------------------------------------------------- #
def subpolicy_kernel(coef_ref, thr_ref, x_ref, o_ref, *, n_valid, compute_dtype):
    """All NUM_STAGES stages applied to one (tb, Np) batch tile.

    coef_ref : SMEM (NUM_STAGES, 5)  per-stage fused scalars [a1, a2, b1, b2, c]
    thr_ref  : SMEM (1,)             solarize threshold
    x_ref    : VMEM (tb, Np)         input tile  (Np = padded C*H*W, lane-dense)
    o_ref    : VMEM (tb, Np)         output tile
    """
    np_total = x_ref.shape[-1]
    need_mask = (n_valid != np_total)      # static Python bool

    x_in = x_ref[...]
    thr = thr_ref[0].astype(compute_dtype)
    inv_n = jnp.float32(1.0 / n_valid)     # static: mean over the TRUE N

    if need_mask:
        lane = jax.lax.broadcasted_iota(jnp.int32, x_in.shape, dimension=1)
        valid = lane < n_valid

    # Row-sum for stage 0 (input pad lanes are zero, mask kept for uniformity).
    xf = x_in.astype(jnp.float32)
    if need_mask:
        xf = jnp.where(valid, xf, 0.0)
    row_sum = jnp.sum(xf, axis=-1, keepdims=True)        # (tb, 1) f32

    x = x_in.astype(compute_dtype)

    for s in range(NUM_STAGES):            # unrolled: straight-line body
        a1 = coef_ref[s, 0].astype(compute_dtype)
        a2 = coef_ref[s, 1].astype(compute_dtype)
        b1 = coef_ref[s, 2]
        b2 = coef_ref[s, 3]
        c = coef_ref[s, 4]

        mean = row_sum * inv_n                             # (tb, 1) f32
        mterm = c * mean                                   # (tb, 1) f32
        off_lo = (b1 + mterm).astype(compute_dtype)        # (tb, 1)
        off_hi = (b2 + mterm).astype(compute_dtype)        # (tb, 1)

        pred = x < thr
        slope = jnp.where(pred, a1, a2)
        offset = jnp.where(pred, off_lo, off_hi)
        x = slope * x + offset

        if s + 1 < NUM_STAGES:
            # Fused: accumulate next stage's row-sum in the same sweep (f32 acc).
            xs = x.astype(jnp.float32)
            if need_mask:
                xs = jnp.where(valid, xs, 0.0)
            row_sum = jnp.sum(xs, axis=-1, keepdims=True)

    o_ref[...] = x.astype(o_ref.dtype)


# --------------------------------------------------------------------------- #
# Wrapper-side policy: coefficients, tiling, VMEM budgeting
# --------------------------------------------------------------------------- #
def _stage_coefficients(stage_weights_raw, magnitudes, temperature):
    """Fold softmaxed stage weights + op magnitudes into per-stage affine scalars.

    Per stage s (w = softmax(raw/T)[s], m = magnitudes):
      brightness: m0*x                   -> w0*m0*x
      invert    : 1 - x                  -> w1 - w1*x
      solarize  : x (x<thr) | 1-x (else) -> w2*x | w2 - w2*x
      contrast  : m3*x + (1-m3)*mean     -> w3*m3*x + w3*(1-m3)*mean
    """
    w = jax.nn.softmax(stage_weights_raw.astype(jnp.float32) / temperature, axis=-1)
    m = magnitudes.astype(jnp.float32)
    a1 = w[:, 0] * m[0] - w[:, 1] + w[:, 2] + w[:, 3] * m[3]
    a2 = w[:, 0] * m[0] - w[:, 1] - w[:, 2] + w[:, 3] * m[3]
    b1 = w[:, 1]
    b2 = w[:, 1] + w[:, 2]
    c = w[:, 3] * (1.0 - m[3])
    coef = jnp.stack([a1, a2, b1, b2, c], axis=-1)          # (NUM_STAGES, 5)
    thr = m[2:3]                                             # (1,)
    return coef, thr


def _round_up(x, m):
    return ((x + m - 1) // m) * m


def _round_down(x, m):
    return (x // m) * m


def _vmem_capacity_bytes():
    try:
        return int(pltpu.get_tpu_info().vmem_capacity_bytes)
    except Exception:
        return 64 << 20          # conservative (v7x per-TC VMEM)


def _is_v5e():
    try:
        kind = jax.devices()[0].device_kind.lower()
    except Exception:
        return False
    return ("v5 lite" in kind) or ("v5e" in kind) or ("v5litepod" in kind)


def _sublane_pack(dtype):
    # 8 rows / vreg for 32-bit, 16 for bf16, 32 for int8.
    return max(8, 32 // jnp.dtype(dtype).itemsize)


def _pick_batch_tile(B, Np, in_itemsize, compute_itemsize, sublane, tile_budget,
                     target_steps=4):
    """Largest batch tile whose full VMEM footprint (double-buffered in/out
    blocks + in-kernel compute-dtype temporaries) fits the budget, rounded to
    the dtype's sublane packing and capped so the grid keeps >= target_steps
    steps for megacore sharding / pipelining."""
    # 2x in + 2x out double buffers (input dtype) + ~2 full-tile compute temps.
    bytes_per_row = Np * (4 * in_itemsize + 2 * compute_itemsize)
    budget_rows = max(1, tile_budget // bytes_per_row)
    cap_rows = max(sublane, _round_down(pl.cdiv(B, target_steps), sublane))
    tb = min(budget_rows, cap_rows, B)
    if tb >= sublane:
        tb = _round_down(tb, sublane)
    elif tb < B:
        # Budget admits less than one sublane-pack of rows: take one pack and
        # rely on the raised vmem limit.
        # TODO(synk): split-N (two-pass row-sum) path for such extreme N.
        tb = min(B, sublane)
    else:
        tb = B                   # tiny batch: full-extent block is legal
    return tb


def sub_policy_forward(x, stage_weights_raw, magnitudes, temperature=TEMPERATURE):
    """x: (B, C, H, W). stage_weights_raw: (NUM_STAGES, NUM_OPS). magnitudes: (NUM_OPS,)."""
    B, C, H, W = x.shape
    N = C * H * W
    Np = _round_up(N, 128)                                   # lane-dense last dim

    coef, thr = _stage_coefficients(stage_weights_raw, magnitudes, temperature)

    x_flat = x.reshape(B, N)
    if Np != N:
        x_flat = jnp.pad(x_flat, ((0, 0), (0, Np - N)))

    in_dtype = x_flat.dtype
    in_itemsize = jnp.dtype(in_dtype).itemsize
    # bf16 element math on v6e/v7x (f32 row-sum accumulation); f32 on v5e.
    if in_dtype == jnp.bfloat16 and not _is_v5e():
        compute_dtype = jnp.bfloat16
    else:
        compute_dtype = jnp.float32
    compute_itemsize = jnp.dtype(compute_dtype).itemsize

    capacity = _vmem_capacity_bytes()
    vmem_limit = (capacity * 3) // 4                         # headroom under physical VMEM
    tile_budget = (vmem_limit * 3) // 4                      # slack for compiler temporaries

    sublane = _sublane_pack(in_dtype)
    tb = _pick_batch_tile(B, Np, in_itemsize, compute_itemsize, sublane, tile_budget)

    footprint = tb * Np * (4 * in_itemsize + 2 * compute_itemsize)
    vmem_limit = int(min(vmem_limit, max(32 << 20, footprint + (8 << 20))))

    grid = (pl.cdiv(B, tb),)

    kernel = functools.partial(subpolicy_kernel, n_valid=N, compute_dtype=compute_dtype)

    cost = pl.CostEstimate(
        flops=int(7 * NUM_STAGES * B * Np),
        transcendentals=0,
        bytes_accessed=int(2 * B * Np * in_itemsize),
    )

    out_flat = pl.pallas_call(
        kernel,
        out_shape=jax.ShapeDtypeStruct((B, Np), in_dtype),
        grid=grid,
        in_specs=[
            pl.BlockSpec(memory_space=pltpu.MemorySpace.SMEM),   # coef table
            pl.BlockSpec(memory_space=pltpu.MemorySpace.SMEM),   # solarize thr
            pl.BlockSpec((tb, Np), lambda i: (i, 0)),            # image tile
        ],
        out_specs=pl.BlockSpec((tb, Np), lambda i: (i, 0)),
        compiler_params=pltpu.CompilerParams(
            dimension_semantics=("parallel",),                   # batch tiles independent
            vmem_limit_bytes=vmem_limit,
        ),
        cost_estimate=cost,
    )(coef, thr, x_flat)

    return out_flat[:, :N].reshape(B, C, H, W)


# --------------------------------------------------------------------------- #
# Pure-JAX reference
# --------------------------------------------------------------------------- #
def sub_policy_reference(x, stage_weights_raw, magnitudes, temperature=TEMPERATURE):
    weights = jax.nn.softmax(stage_weights_raw / temperature, axis=-1)
    cur = x
    for s in range(NUM_STAGES):
        mean = jnp.mean(cur, axis=(1, 2, 3), keepdims=True)
        ops = [
            cur * magnitudes[0],
            1.0 - cur,
            jnp.where(cur < magnitudes[2], cur, 1.0 - cur),
            mean + (cur - mean) * magnitudes[3],
        ]
        cur = sum(weights[s, k] * ops[k] for k in range(NUM_OPS))
    return cur


if __name__ == "__main__":
    key = jax.random.PRNGKey(0)
    B, C, H, W = 2, 4, 16, 16
    x = jax.random.uniform(key, (B, C, H, W), dtype=jnp.float32)

    # deterministic parameter init per module __init__:
    # _weights = ones(len(operations)) for every (deep-copied) stage
    stage_weights_raw = jnp.ones((NUM_STAGES, NUM_OPS), dtype=jnp.float32)
    # per-op magnitudes (fixed, deterministic); magnitudes[1] unused (invert)
    magnitudes = jnp.array([1.2, 0.0, 0.5, 0.8], dtype=jnp.float32)

    out = sub_policy_forward(x, stage_weights_raw, magnitudes)
    out = jax.block_until_ready(out)

    ref = sub_policy_reference(x, stage_weights_raw, magnitudes)
    assert out.shape == (B, C, H, W)
    assert jnp.allclose(out, ref, atol=1e-5, rtol=1e-5), "mismatch vs reference"

    print("KERNEL_OK")
</pallas_src>

<mosaic_0001>
module attributes {stable_mosaic.version = 11 : i64} {
  func.func @subpolicy_kernel(%arg0: i32, %arg1: memref<3x5xf32, #tpu.memory_space<smem>>, %arg2: memref<1xf32, #tpu.memory_space<smem>>, %arg3: memref<2x1024xf32, #tpu.memory_space<vmem>>, %arg4: memref<2x1024xf32, #tpu.memory_space<vmem>>) attributes {dimension_semantics = [#tpu.dimension_semantics<parallel>], iteration_bounds = array<i64: 1>, scalar_prefetch = 0 : i64, scratch_operands = 0 : i64, tpu.core_type = #tpu.core_type<tc>, window_params = [{transform_indices = @transform_0, window_bounds = array<i64: 3, 5>}, {transform_indices = @transform_1, window_bounds = array<i64: 1>}, {transform_indices = @transform_2, window_bounds = array<i64: 2, 1024>}, {transform_indices = @transform_3, window_bounds = array<i64: 2, 1024>}]} {
    %c0 = arith.constant 0 : index
    %c0_0 = arith.constant 0 : index
    %0 = vector.load %arg3[%c0, %c0_0] : memref<2x1024xf32, #tpu.memory_space<vmem>>, vector<2x1024xf32>
    %c0_1 = arith.constant 0 : index
    %1 = memref.load %arg2[%c0_1] : memref<1xf32, #tpu.memory_space<smem>>
    %cst = arith.constant dense<0.000000e+00> : vector<2xf32>
    %2 = vector.multi_reduction <add>, %0, %cst [1] : vector<2x1024xf32> to vector<2xf32>
    %3 = vector.shape_cast %2 : vector<2xf32> to vector<2x1xf32>
    %c0_2 = arith.constant 0 : index
    %c0_3 = arith.constant 0 : index
    %4 = memref.load %arg1[%c0_2, %c0_3] : memref<3x5xf32, #tpu.memory_space<smem>>
    %c0_4 = arith.constant 0 : index
    %c1 = arith.constant 1 : index
    %5 = memref.load %arg1[%c0_4, %c1] : memref<3x5xf32, #tpu.memory_space<smem>>
    %c0_5 = arith.constant 0 : index
    %c2 = arith.constant 2 : index
    %6 = memref.load %arg1[%c0_5, %c2] : memref<3x5xf32, #tpu.memory_space<smem>>
    %c0_6 = arith.constant 0 : index
    %c3 = arith.constant 3 : index
    %7 = memref.load %arg1[%c0_6, %c3] : memref<3x5xf32, #tpu.memory_space<smem>>
    %c0_7 = arith.constant 0 : index
    %c4 = arith.constant 4 : index
    %8 = memref.load %arg1[%c0_7, %c4] : memref<3x5xf32, #tpu.memory_space<smem>>
    %cst_8 = arith.constant 9.765625E-4 : f32
    %9 = vector.broadcast %cst_8 : f32 to vector<2x1xf32>
    %10 = arith.mulf %3, %9 : vector<2x1xf32>
    %11 = vector.broadcast %8 : f32 to vector<2x1xf32>
    %12 = arith.mulf %11, %10 : vector<2x1xf32>
    %13 = vector.broadcast %6 : f32 to vector<2x1xf32>
    %14 = arith.addf %13, %12 : vector<2x1xf32>
    %15 = vector.broadcast %7 : f32 to vector<2x1xf32>
    %16 = arith.addf %15, %12 : vector<2x1xf32>
    %17 = vector.broadcast %1 : f32 to vector<2x1024xf32>
    %18 = arith.cmpf olt, %0, %17 : vector<2x1024xf32>
    %19 = vector.broadcast %4 : f32 to vector<2x1024xf32>
    %20 = vector.broadcast %5 : f32 to vector<2x1024xf32>
    %21 = arith.select %18, %19, %20 : vector<2x1024xi1>, vector<2x1024xf32>
    %22 = vector.shape_cast %14 : vector<2x1xf32> to vector<2x1xf32>
    %23 = vector.broadcast %22 : vector<2x1xf32> to vector<2x1024xf32>
    %24 = vector.shape_cast %16 : vector<2x1xf32> to vector<2x1xf32>
    %25 = vector.broadcast %24 : vector<2x1xf32> to vector<2x1024xf32>
    %26 = arith.select %18, %23, %25 : vector<2x1024xi1>, vector<2x1024xf32>
    %27 = arith.mulf %21, %0 : vector<2x1024xf32>
    %28 = arith.addf %27, %26 : vector<2x1024xf32>
    %cst_9 = arith.constant dense<0.000000e+00> : vector<2xf32>
    %29 = vector.multi_reduction <add>, %28, %cst_9 [1] : vector<2x1024xf32> to vector<2xf32>
    %30 = vector.shape_cast %29 : vector<2xf32> to vector<2x1xf32>
    %c1_10 = arith.constant 1 : index
    %c0_11 = arith.constant 0 : index
    %31 = memref.load %arg1[%c1_10, %c0_11] : memref<3x5xf32, #tpu.memory_space<smem>>
    %c1_12 = arith.constant 1 : index
    %c1_13 = arith.constant 1 : index
    %32 = memref.load %arg1[%c1_12, %c1_13] : memref<3x5xf32, #tpu.memory_space<smem>>
    %c1_14 = arith.constant 1 : index
    %c2_15 = arith.constant 2 : index
    %33 = memref.load %arg1[%c1_14, %c2_15] : memref<3x5xf32, #tpu.memory_space<smem>>
    %c1_16 = arith.constant 1 : index
    %c3_17 = arith.constant 3 : index
    %34 = memref.load %arg1[%c1_16, %c3_17] : memref<3x5xf32, #tpu.memory_space<smem>>
    %c1_18 = arith.constant 1 : index
    %c4_19 = arith.constant 4 : index
    %35 = memref.load %arg1[%c1_18, %c4_19] : memref<3x5xf32, #tpu.memory_space<smem>>
    %cst_20 = arith.constant 9.765625E-4 : f32
    %36 = vector.broadcast %cst_20 : f32 to vector<2x1xf32>
    %37 = arith.mulf %30, %36 : vector<2x1xf32>
    %38 = vector.broadcast %35 : f32 to vector<2x1xf32>
    %39 = arith.mulf %38, %37 : vector<2x1xf32>
    %40 = vector.broadcast %33 : f32 to vector<2x1xf32>
    %41 = arith.addf %40, %39 : vector<2x1xf32>
    %42 = vector.broadcast %34 : f32 to vector<2x1xf32>
    %43 = arith.addf %42, %39 : vector<2x1xf32>
    %44 = vector.broadcast %1 : f32 to vector<2x1024xf32>
    %45 = arith.cmpf olt, %28, %44 : vector<2x1024xf32>
    %46 = vector.broadcast %31 : f32 to vector<2x1024xf32>
    %47 = vector.broadcast %32 : f32 to vector<2x1024xf32>
    %48 = arith.select %45, %46, %47 : vector<2x1024xi1>, vector<2x1024xf32>
    %49 = vector.shape_cast %41 : vector<2x1xf32> to vector<2x1xf32>
    %50 = vector.broadcast %49 : vector<2x1xf32> to vector<2x1024xf32>
    %51 = vector.shape_cast %43 : vector<2x1xf32> to vector<2x1xf32>
    %52 = vector.broadcast %51 : vector<2x1xf32> to vector<2x1024xf32>
    %53 = arith.select %45, %50, %52 : vector<2x1024xi1>, vector<2x1024xf32>
    %54 = arith.mulf %48, %28 : vector<2x1024xf32>
    %55 = arith.addf %54, %53 : vector<2x1024xf32>
    %cst_21 = arith.constant dense<0.000000e+00> : vector<2xf32>
    %56 = vector.multi_reduction <add>, %55, %cst_21 [1] : vector<2x1024xf32> to vector<2xf32>
    %57 = vector.shape_cast %56 : vector<2xf32> to vector<2x1xf32>
    %c2_22 = arith.constant 2 : index
    %c0_23 = arith.constant 0 : index
    %58 = memref.load %arg1[%c2_22, %c0_23] : memref<3x5xf32, #tpu.memory_space<smem>>
    %c2_24 = arith.constant 2 : index
    %c1_25 = arith.constant 1 : index
    %59 = memref.load %arg1[%c2_24, %c1_25] : memref<3x5xf32, #tpu.memory_space<smem>>
    %c2_26 = arith.constant 2 : index
    %c2_27 = arith.constant 2 : index
    %60 = memref.load %arg1[%c2_26, %c2_27] : memref<3x5xf32, #tpu.memory_space<smem>>
    %c2_28 = arith.constant 2 : index
    %c3_29 = arith.constant 3 : index
    %61 = memref.load %arg1[%c2_28, %c3_29] : memref<3x5xf32, #tpu.memory_space<smem>>
    %c2_30 = arith.constant 2 : index
    %c4_31 = arith.constant 4 : index
    %62 = memref.load %arg1[%c2_30, %c4_31] : memref<3x5xf32, #tpu.memory_space<smem>>
    %cst_32 = arith.constant 9.765625E-4 : f32
    %63 = vector.broadcast %cst_32 : f32 to vector<2x1xf32>
    %64 = arith.mulf %57, %63 : vector<2x1xf32>
    %65 = vector.broadcast %62 : f32 to vector<2x1xf32>
    %66 = arith.mulf %65, %64 : vector<2x1xf32>
    %67 = vector.broadcast %60 : f32 to vector<2x1xf32>
    %68 = arith.addf %67, %66 : vector<2x1xf32>
    %69 = vector.broadcast %61 : f32 to vector<2x1xf32>
    %70 = arith.addf %69, %66 : vector<2x1xf32>
    %71 = vector.broadcast %1 : f32 to vector<2x1024xf32>
    %72 = arith.cmpf olt, %55, %71 : vector<2x1024xf32>
    %73 = vector.broadcast %58 : f32 to vector<2x1024xf32>
    %74 = vector.broadcast %59 : f32 to vector<2x1024xf32>
    %75 = arith.select %72, %73, %74 : vector<2x1024xi1>, vector<2x1024xf32>
    %76 = vector.shape_cast %68 : vector<2x1xf32> to vector<2x1xf32>
    %77 = vector.broadcast %76 : vector<2x1xf32> to vector<2x1024xf32>
    %78 = vector.shape_cast %70 : vector<2x1xf32> to vector<2x1xf32>
    %79 = vector.broadcast %78 : vector<2x1xf32> to vector<2x1024xf32>
    %80 = arith.select %72, %77, %79 : vector<2x1024xi1>, vector<2x1024xf32>
    %81 = arith.mulf %75, %55 : vector<2x1024xf32>
    %82 = arith.addf %81, %80 : vector<2x1024xf32>
    %c0_33 = arith.constant 0 : index
    %c0_34 = arith.constant 0 : index
    %83 = vector.load %arg4[%c0_33, %c0_34] : memref<2x1024xf32, #tpu.memory_space<vmem>>, vector<2x1024xf32>
    tpu.vector_store %arg4[%c0_33, %c0_34], %82 {strides = array<i32>} : memref<2x1024xf32, #tpu.memory_space<vmem>>, vector<2x1024xf32>,
    return
  }
  func.func @transform_0(%arg0: i32) -> (i32, i32) {
    %c0_i32 = arith.constant 0 : i32
    %c0_i32_0 = arith.constant 0 : i32
    %c0_i32_1 = arith.constant 0 : i32
    return %c0_i32, %c0_i32_0 : i32, i32
  }
  func.func @transform_1(%arg0: i32) -> i32 {
    %c0_i32 = arith.constant 0 : i32
    %c0_i32_0 = arith.constant 0 : i32
    return %c0_i32 : i32
  }
  func.func @transform_2(%arg0: i32) -> (i32, i32) {
    %c0_i32 = arith.constant 0 : i32
    %c0_i32_0 = arith.constant 0 : i32
    return %arg0, %c0_i32 : i32, i32
  }
  func.func @transform_3(%arg0: i32) -> (i32, i32) {
    %c0_i32 = arith.constant 0 : i32
    %c0_i32_0 = arith.constant 0 : i32
    return %arg0, %c0_i32 : i32, i32
  }
}

</mosaic_0001>

<llo_original>
// kernel: tpu_custom_call.1
$region0: #{tpu_custom_call.1}
  #allocation0 [shape = 'u32[]', space=smem, size = 0x4, offset = 0x4, fixed_abs, tag = 'smem constant byte address 0x4 - core index']
  #allocation1 [shape = 'u32[72,128]{1,0:T(1,128)}', space=vmem, size = 0x9000, scoped, tag = 'internal scratch']
  #allocation2 [shape = 'f32[1]{0:T(128)S(6)}', space=smem, size = 0x200, scoped, tag = 'scoped memory for tpu_custom_call.1']
  %s0 = inlined_call_operand.hbm [shape: f32[3,5], index: 0, kind: input, shape index: {}]
  %s1 = inlined_call_operand.<no memory space> [shape: f32[1], index: 1, kind: input, shape index: {}]
  %s2 = inlined_call_operand.hbm [shape: f32[2,1024], index: 2, kind: input, shape index: {}]
  %s3 = inlined_call_operand.hbm [shape: f32[2,1024], index: 3, kind: output, shape index: {}]
  %s4 = sld [smem:[#allocation0]]
  $region30: #{tpu_custom_call.1} parent=0
    _
  %s6 = ssub.s32 1, %s4
  %s7 = scalar_select 0, %s6, %s4
  %8 = sst [smem:[#allocation2]] %s1
  $region1: #{tpu_custom_call.1} parent=0
    #allocation3 [shape = 'u8[2048]{0}', space=smem, size = 0x800, scoped, tag = 'input window, operand 0, single buffered']
    #allocation4 [shape = 's32[1]{0}', space=sflag, size = 0x4, scoped, tag = 'scoped memory for tpu_custom_call.1']
    #allocation5 [shape = 's32[1]{0}', space=sflag, size = 0x4, scoped, tag = 'scoped memory for tpu_custom_call.1']
    #allocation6 [shape = 's32[1]{0}', space=sflag, size = 0x4, scoped, tag = 'scoped memory for tpu_custom_call.1']
    #allocation7 [shape = 'u8[8192]{0}', space=vmem, size = 0x2000, scoped, tag = 'input window, operand 2, single buffered']
    #allocation8 [shape = 'u8[8192]{0}', space=vmem, size = 0x2000, scoped, tag = 'output window, operand 0, single buffered']
    %9 = vsyncpa [#allocation6], 0
    %10 = vsyncpa [#allocation4], 0
    %11 = vsyncpa [#allocation5], 0
    // Predicated region
    $region2: #{tpu_custom_call.1} parent=1 // pred_check
      _
    $region3: #{tpu_custom_call.1} parent=1 // pred_check_branch
      %13 = sbr.rel (0) target = $region5
    $region4: #{tpu_custom_call.1} parent=1 // pred_region
      %15 = vsyncadd [#allocation6], 0
      %s17 = sshll.u32 %s0, 4
      %s18 = int_to_ptr.hbm [resolvable:$true] %s17
      %20 = dma.hbm_to_smem %s18, 64, [#allocation3], [#allocation6]
    $region5: #{tpu_custom_call.1} parent=1 // pred_fallthru
      _
    // Predicated region
    $region6: #{tpu_custom_call.1} parent=1 // pred_check
      _
    $region7: #{tpu_custom_call.1} parent=1 // pred_check_branch
      %22 = sbr.rel (0) target = $region9
    $region8: #{tpu_custom_call.1} parent=1 // pred_region
      _
    $region9: #{tpu_custom_call.1} parent=1 // pred_fallthru
      _
    // Predicated region
    $region10: #{tpu_custom_call.1} parent=1 // pred_check
      _
    $region11: #{tpu_custom_call.1} parent=1 // pred_check_branch
      %24 = sbr.rel (0) target = $region13
    $region12: #{tpu_custom_call.1} parent=1 // pred_region
      %26 = vsyncadd [#allocation4], 0
      %s28 = sshll.u32 %s2, 4
      %s29 = int_to_ptr.hbm [resolvable:$true] %s28
      %s30 = sshll.u32 [#allocation7], 4
      %s31 = int_to_ptr.vmem [resolvable:$true] %s30
      %33 = dma.hbm_to_vmem [thread:$0]  %s29, 256, %s31, [#allocation4]
    $region13: #{tpu_custom_call.1} parent=1 // pred_fallthru
      _
    // Predicated region
    $region14: #{tpu_custom_call.1} parent=1 // pred_check
      _
    $region15: #{tpu_custom_call.1} parent=1 // pred_check_branch
      %35 = sbr.rel (0) target = $region17
    $region16: #{tpu_custom_call.1} parent=1 // pred_region
      %37 = dma.done [#allocation6], 64
    $region17: #{tpu_custom_call.1} parent=1 // pred_fallthru
      _
    // Predicated region
    $region18: #{tpu_custom_call.1} parent=1 // pred_check
      _
    $region19: #{tpu_custom_call.1} parent=1 // pred_check_branch
      %39 = sbr.rel (0) target = $region21
    $region20: #{tpu_custom_call.1} parent=1 // pred_region
      %41 = dma.done [#allocation4], 256
    $region21: #{tpu_custom_call.1} parent=1 // pred_fallthru
      _
    %42 = sfence
    %v43 = vld [vmem:[#allocation7] sm:$0xff]
    %v44 = vld [vmem:[#allocation7 + $0x8] sm:$0xff]
    %s45 = sld [smem:[#allocation2]]
    %48 = vst [vmem:[#allocation1] ss:$4 sm:$0xff] %v43
    %s49 = scalar_lea.vmem [#allocation1], 32
    %50 = vst [vmem:[%s49] ss:$4 sm:$0xff] %v44
    %v51 = vld.sshfl [vmem:[#allocation1] sm:$0xff pattern:$0x73625140]
    %v52 = vld.sshfl [vmem:[#allocation1 + $0x8] sm:$0xff pattern:$0x73625140]
    %v53 = vld.sshfl [vmem:[#allocation1 + $0x10] sm:$0xff pattern:$0x73625140]
    %v54 = vld.sshfl [vmem:[#allocation1 + $0x18] sm:$0xff pattern:$0x73625140]
    %v55 = vld.sshfl [vmem:[#allocation1 + $0x20] sm:$0xff pattern:$0x73625140]
    %v56 = vld.sshfl [vmem:[#allocation1 + $0x28] sm:$0xff pattern:$0x73625140]
    %v57 = vld.sshfl [vmem:[#allocation1 + $0x30] sm:$0xff pattern:$0x73625140]
    %v58 = vld.sshfl [vmem:[#allocation1 + $0x38] sm:$0xff pattern:$0x73625140]
    %vm67 = vcmask 1041408
    %v68 = vsel %vm67, %v51, 0.0
    %v69 = vsel %vm67, %v52, 0.0
    %v70 = vadd.f32 %v68, %v69
    %v71 = vsel %vm67, %v53, 0.0
    %v72 = vadd.f32 %v70, %v71
    %v73 = vsel %vm67, %v54, 0.0
    %v74 = vadd.f32 %v72, %v73
    %v75 = vsel %vm67, %v55, 0.0
    %v76 = vadd.f32 %v74, %v75
    %v77 = vsel %vm67, %v56, 0.0
    %v78 = vadd.f32 %v76, %v77
    %v79 = vsel %vm67, %v57, 0.0
    %v80 = vadd.f32 %v78, %v79
    %v81 = vsel %vm67, %v58, 0.0
    %v82 = vadd.f32 %v80, %v81
    %83 = vadd.xlane.f32.xlu0 %v82
    %v84 = vpop.xlane.xlu0 %83
    %s85 = sld [smem:[#allocation3]]
    %s86 = sld [smem:[#allocation3 + $0x1]]
    %s87 = sld [smem:[#allocation3 + $0x2]]
    %s88 = sld [smem:[#allocation3 + $0x3]]
    %s89 = sld [smem:[#allocation3 + $0x4]]
    %v90 = vmul.f32 %v84, 0.0009765625
    %v91 = vstv %s89
    %v92 = vmul.f32 %v91, %v90
    %v93 = vstv %s87
    %v94 = vadd.f32 %v93, %v92
    %v95 = vstv %s88
    %v96 = vadd.f32 %v95, %v92
    %v97 = vstv %s45
    %vm98 = vcmp.lt.f32.partialorder %v43, %v97
    %vm99 = vcmp.lt.f32.partialorder %v44, %v97
    %v100 = vstv %s85
    %v101 = vstv %s86
    %v102 = vsel %vm98, %v100, %v101
    %v103 = vsel %vm99, %v100, %v101
    %v106 = vunpack.c.l.s4 269488144
    %v107 = vunpack.c.0.s8 %v106
    %v108 = vperm.slane %v94, %v107
    %v112 = vunpack.c.l.s4 269488144
    %v113 = vunpack.c.0.s8 %v112
    %v114 = vperm.slane %v96, %v113
    %v116 = vsel %vm98, %v108, %v114
    %v117 = vsel %vm99, %v108, %v114
    %v118 = vmul.f32 %v102, %v43
    %v119 = vmul.f32 %v103, %v44
    %v120 = vadd.f32 %v118, %v116
    %v121 = vadd.f32 %v119, %v117
    %124 = vst [vmem:[#allocation1] ss:$4 sm:$0xff] %v120
    %s125 = scalar_lea.vmem [#allocation1], 32
    %126 = vst [vmem:[%s125] ss:$4 sm:$0xff] %v121
    %v127 = vld.sshfl [vmem:[#allocation1] sm:$0xff pattern:$0x73625140]
    %v128 = vld.sshfl [vmem:[#allocation1 + $0x8] sm:$0xff pattern:$0x73625140]
    %v129 = vld.sshfl [vmem:[#allocation1 + $0x10] sm:$0xff pattern:$0x73625140]
    %v130 = vld.sshfl [vmem:[#allocation1 + $0x18] sm:$0xff pattern:$0x73625140]
    %v131 = vld.sshfl [vmem:[#allocation1 + $0x20] sm:$0xff pattern:$0x73625140]
    %v132 = vld.sshfl [vmem:[#allocation1 + $0x28] sm:$0xff pattern:$0x73625140]
    %v133 = vld.sshfl [vmem:[#allocation1 + $0x30] sm:$0xff pattern:$0x73625140]
    %v134 = vld.sshfl [vmem:[#allocation1 + $0x38] sm:$0xff pattern:$0x73625140]
    %v143 = vsel %vm67, %v127, 0.0
    %v144 = vsel %vm67, %v128, 0.0
    %v145 = vadd.f32 %v143, %v144
    %v146 = vsel %vm67, %v129, 0.0
    %v147 = vadd.f32 %v145, %v146
    %v148 = vsel %vm67, %v130, 0.0
    %v149 = vadd.f32 %v147, %v148
    %v150 = vsel %vm67, %v131, 0.0
    %v151 = vadd.f32 %v149, %v150
    %v152 = vsel %vm67, %v132, 0.0
    %v153 = vadd.f32 %v151, %v152
    %v154 = vsel %vm67, %v133, 0.0
    %v155 = vadd.f32 %v153, %v154
    %v156 = vsel %vm67, %v134, 0.0
    %v157 = vadd.f32 %v155, %v156
    %158 = vadd.xlane.f32.xlu0 %v157
    %v159 = vpop.xlane.xlu0 %158
    %s160 = sld [smem:[#allocation3 + $0x80]]
    %s161 = sld [smem:[#allocation3 + $0x81]]
    %s162 = sld [smem:[#allocation3 + $0x82]]
    %s163 = sld [smem:[#allocation3 + $0x83]]
    %s164 = sld [smem:[#allocation3 + $0x84]]
    %v165 = vmul.f32 %v159, 0.0009765625
    %v166 = vstv %s164
    %v167 = vmul.f32 %v166, %v165
    %v168 = vstv %s162
    %v169 = vadd.f32 %v168, %v167
    %v170 = vstv %s163
    %v171 = vadd.f32 %v170, %v167
    %vm172 = vcmp.lt.f32.partialorder %v120, %v97
    %vm173 = vcmp.lt.f32.partialorder %v121, %v97
    %v174 = vstv %s160
    %v175 = vstv %s161
    %v176 = vsel %vm172, %v174, %v175
    %v177 = vsel %vm173, %v174, %v175
    %v180 = vunpack.c.l.s4 269488144
    %v181 = vunpack.c.0.s8 %v180
    %v182 = vperm.slane %v169, %v181
    %v186 = vunpack.c.l.s4 269488144
    %v187 = vunpack.c.0.s8 %v186
    %v188 = vperm.slane %v171, %v187
    %v190 = vsel %vm172, %v182, %v188
    %v191 = vsel %vm173, %v182, %v188
    %v192 = vmul.f32 %v176, %v120
    %v193 = vmul.f32 %v177, %v121
    %v194 = vadd.f32 %v192, %v190
    %v195 = vadd.f32 %v193, %v191
    %198 = vst [vmem:[#allocation1] ss:$4 sm:$0xff] %v194
    %s199 = scalar_lea.vmem [#allocation1], 32
    %200 = vst [vmem:[%s199] ss:$4 sm:$0xff] %v195
    %v201 = vld.sshfl [vmem:[#allocation1] sm:$0xff pattern:$0x73625140]
    %v202 = vld.sshfl [vmem:[#allocation1 + $0x8] sm:$0xff pattern:$0x73625140]
    %v203 = vld.sshfl [vmem:[#allocation1 + $0x10] sm:$0xff pattern:$0x73625140]
    %v204 = vld.sshfl [vmem:[#allocation1 + $0x18] sm:$0xff pattern:$0x73625140]
    %v205 = vld.sshfl [vmem:[#allocation1 + $0x20] sm:$0xff pattern:$0x73625140]
    %v206 = vld.sshfl [vmem:[#allocation1 + $0x28] sm:$0xff pattern:$0x73625140]
    %v207 = vld.sshfl [vmem:[#allocation1 + $0x30] sm:$0xff pattern:$0x73625140]
    %v208 = vld.sshfl [vmem:[#allocation1 + $0x38] sm:$0xff pattern:$0x73625140]
    %v217 = vsel %vm67, %v201, 0.0
    %v218 = vsel %vm67, %v202, 0.0
    %v219 = vadd.f32 %v217, %v218
    %v220 = vsel %vm67, %v203, 0.0
    %v221 = vadd.f32 %v219, %v220
    %v222 = vsel %vm67, %v204, 0.0
    %v223 = vadd.f32 %v221, %v222
    %v224 = vsel %vm67, %v205, 0.0
    %v225 = vadd.f32 %v223, %v224
    %v226 = vsel %vm67, %v206, 0.0
    %v227 = vadd.f32 %v225, %v226
    %v228 = vsel %vm67, %v207, 0.0
    %v229 = vadd.f32 %v227, %v228
    %v230 = vsel %vm67, %v208, 0.0
    %v231 = vadd.f32 %v229, %v230
    %232 = vadd.xlane.f32.xlu0 %v231
    %v233 = vpop.xlane.xlu0 %232
    %s234 = sld [smem:[#allocation3 + $0x100]]
    %s235 = sld [smem:[#allocation3 + $0x101]]
    %s236 = sld [smem:[#allocation3 + $0x102]]
    %s237 = sld [smem:[#allocation3 + $0x103]]
    %s238 = sld [smem:[#allocation3 + $0x104]]
    %v239 = vmul.f32 %v233, 0.0009765625
    %v240 = vstv %s238
    %v241 = vmul.f32 %v240, %v239
    %v242 = vstv %s236
    %v243 = vadd.f32 %v242, %v241
    %v244 = vstv %s237
    %v245 = vadd.f32 %v244, %v241
    %vm246 = vcmp.lt.f32.partialorder %v194, %v97
    %vm247 = vcmp.lt.f32.partialorder %v195, %v97
    %v248 = vstv %s234
    %v249 = vstv %s235
    %v250 = vsel %vm246, %v248, %v249
    %v251 = vsel %vm247, %v248, %v249
    %v254 = vunpack.c.l.s4 269488144
    %v255 = vunpack.c.0.s8 %v254
    %v256 = vperm.slane %v243, %v255
    %v260 = vunpack.c.l.s4 269488144
    %v261 = vunpack.c.0.s8 %v260
    %v262 = vperm.slane %v245, %v261
    %v264 = vsel %vm246, %v256, %v262
    %v265 = vsel %vm247, %v256, %v262
    %v266 = vmul.f32 %v250, %v194
    %v267 = vmul.f32 %v251, %v195
    %v268 = vadd.f32 %v266, %v264
    %v269 = vadd.f32 %v267, %v265
    %270 = vst [vmem:[#allocation8] sm:$0xff] %v268
    %271 = vst [vmem:[#allocation8 + $0x8] sm:$0xff] %v269
    // Predicated region
    $region22: #{tpu_custom_call.1} parent=1 // pred_check
      _
    $region23: #{tpu_custom_call.1} parent=1 // pred_check_branch
      %273 = sbr.rel (0) target = $region25
    $region24: #{tpu_custom_call.1} parent=1 // pred_region
      %275 = vsyncadd [#allocation5], 0
      %s277 = sshll.u32 [#allocation8], 4
      %s278 = int_to_ptr.vmem [resolvable:$true] %s277
      %s279 = sshll.u32 %s3, 4
      %s280 = int_to_ptr.hbm [resolvable:$true] %s279
      %282 = dma.vmem_to_hbm [thread:$0]  %s278, 256, %s280, [#allocation5]
    $region25: #{tpu_custom_call.1} parent=1 // pred_fallthru
      _
    // Predicated region
    $region26: #{tpu_custom_call.1} parent=1 // pred_check
      _
    $region27: #{tpu_custom_call.1} parent=1 // pred_check_branch
      %284 = sbr.rel (0) target = $region29
    $region28: #{tpu_custom_call.1} parent=1 // pred_region
      %286 = dma.done [#allocation5], 256
    $region29: #{tpu_custom_call.1} parent=1 // pred_fallthru
      _
    %287 = vsyncpa [#allocation4], 1
    %288 = vsyncpa [#allocation5], 1
    %289 = vsyncpa [#allocation6], 1

</llo_original>
